<compile_context>
chip_gen: v6e
topology: v6e:2x2x1
jax: 0.10.0
libtpu: 0.0.40
codegen_flags: <defaults>
</compile_context>

<pallas_src>
import math

import jax
import jax.numpy as jnp
from jax.experimental import pallas as pl
from jax.experimental.pallas import tpu as pltpu


# ---------------------------------------------------------------------------
# Kernel bodies (pure VPU elementwise; dtype promotion happens in-kernel so the
# pallas_call reads x at its native width -- no wrapper-level cast pass).
# ---------------------------------------------------------------------------

def _add_row_bias_kernel(x_ref, b_ref, o_ref):
    # x: (TR, F) native dtype, b: (1, F) promoted dtype -> broadcast over rows.
    o_ref[...] = x_ref[...].astype(o_ref.dtype) + b_ref[...]


def _add_col_bias_kernel(x_ref, b_ref, o_ref):
    # x: (TR, L) native dtype, b: (TR, 1) promoted dtype -> broadcast over lanes.
    o_ref[...] = x_ref[...].astype(o_ref.dtype) + b_ref[...]


# ---------------------------------------------------------------------------
# Tiling heuristics (kernel is purely HBM-bound -> tile size is the dominant lever).
# ---------------------------------------------------------------------------

_TILE_BUDGET_BYTES = 4 << 20    # ~4 MiB tile: 85%+ of measured HBM roofline (v6e)
_MIN_PIPELINE_BYTES = 1 << 20   # below this a single un-pipelined tile is fine
_MIN_GRID_STEPS = 4             # keep DMA/compute overlap + work for both v7x TCs


def _choose_tile_rows(n_rows, n_cols, itemsize, row_align=8):
    """Row tile: as big as the ~4 MiB budget allows (sized on the wider of the in/out
    dtypes), kept a multiple of `row_align` for partial tiles, and clamped so inputs
    >= 1 MiB get at least _MIN_GRID_STEPS grid steps of pipelining."""
    row_bytes = max(n_cols * itemsize, 1)
    total_bytes = n_rows * row_bytes
    budget_rows = max(row_align, _TILE_BUDGET_BYTES // row_bytes)
    tile = min(n_rows, budget_rows)
    if total_bytes >= _MIN_PIPELINE_BYTES:
        tile = min(tile, max(row_align, pl.cdiv(n_rows, _MIN_GRID_STEPS)))
    if tile < n_rows:
        tile = max(row_align, (tile // row_align) * row_align)
    return tile


def _vmem_limit_bytes(in_tile_bytes, out_tile_bytes, bias_bytes):
    """Double-buffered in + out tiles + resident bias + slack.  Floor at 32 MiB (v5e's
    scoped default is only 16 MiB), cap at 48 MiB (< v7x's 64 MiB per-TC physical)."""
    need = 2 * (in_tile_bytes + out_tile_bytes) + 2 * bias_bytes + (2 << 20)
    return int(min(48 << 20, max(32 << 20, need)))


def _fold_rows_into_lanes(n_rows, n_cols):
    """Fold factor g: fold g rows into the lane axis so the output last dim becomes a
    multiple of 128 (unmasked lane-dense stores).  Requires g to divide n_rows."""
    if n_cols % 128 == 0:
        return 1
    g = 128 // math.gcd(n_cols, 128)
    if g > 1 and n_rows % g == 0:
        return g
    return 1


# ---------------------------------------------------------------------------
# pallas_call wrappers
# ---------------------------------------------------------------------------

def _add_bias_2d(x2d, bias_row, out_dtype, donate_x=False):
    """x2d: (R, F) native dtype; bias_row: (1, F) promoted dtype, grid-resident."""
    R, F = x2d.shape
    out_itemsize = jnp.dtype(out_dtype).itemsize
    tr = _choose_tile_rows(R, F, max(x2d.dtype.itemsize, out_itemsize))
    vmem = _vmem_limit_bytes(tr * F * x2d.dtype.itemsize,
                             tr * F * out_itemsize,
                             bias_row.size * bias_row.dtype.itemsize)
    alias = {0: 0} if (donate_x and x2d.dtype == jnp.dtype(out_dtype)) else {}
    return pl.pallas_call(
        _add_row_bias_kernel,
        out_shape=jax.ShapeDtypeStruct((R, F), out_dtype),
        grid=(pl.cdiv(R, tr),),
        in_specs=[
            pl.BlockSpec((tr, F), lambda i: (i, 0)),
            pl.BlockSpec((1, F), lambda i: (0, 0)),   # bias stays resident
        ],
        out_specs=pl.BlockSpec((tr, F), lambda i: (i, 0)),
        input_output_aliases=alias,
        compiler_params=pltpu.CompilerParams(
            # TODO(synk): if xprof shows one v7x TensorCore idle, switch this axis to
            # pltpu.CORE_PARALLEL; on v5e/v6e (1 TC) it is a no-op either way.
            dimension_semantics=("parallel",),
            vmem_limit_bytes=vmem,
        ),
    )(x2d, bias_row)


def _add_bias_rows(x2d, bias_col, tr, out_dtype, donate_x=False):
    """x2d: (R, L) native dtype; bias_col: (tr, 1) C-periodic promoted-dtype column that
    stays resident across the whole grid (tr is a multiple of C, or tr == R)."""
    R, L = x2d.shape
    out_itemsize = jnp.dtype(out_dtype).itemsize
    vmem = _vmem_limit_bytes(tr * L * x2d.dtype.itemsize,
                             tr * L * out_itemsize,
                             bias_col.size * bias_col.dtype.itemsize)
    alias = {0: 0} if (donate_x and x2d.dtype == jnp.dtype(out_dtype)) else {}
    return pl.pallas_call(
        _add_col_bias_kernel,
        out_shape=jax.ShapeDtypeStruct((R, L), out_dtype),
        grid=(pl.cdiv(R, tr),),
        in_specs=[
            pl.BlockSpec((tr, L), lambda i: (i, 0)),
            pl.BlockSpec((tr, 1), lambda i: (0, 0)),  # resident periodic bias column
        ],
        out_specs=pl.BlockSpec((tr, L), lambda i: (i, 0)),
        input_output_aliases=alias,
        compiler_params=pltpu.CompilerParams(
            dimension_semantics=("parallel",),
            vmem_limit_bytes=vmem,
        ),
    )(x2d, bias_col)


# ---------------------------------------------------------------------------
# Module wrapper
# ---------------------------------------------------------------------------

class AddBiasPallas:
    """JAX/Pallas equivalent of the PyTorch AddBias module.

    PyTorch stores the parameter as bias.unsqueeze(1) -> (F, 1); forward adds
    bias.t().view(1, -1) for 2-D inputs and bias.t().view(1, -1, 1, 1) for 4-D
    (NCHW) inputs, with normal type promotion on the broadcast add.
    """

    def __init__(self, bias):
        bias = jnp.asarray(bias)
        self._bias = bias.reshape(-1, 1)        # like nn.Parameter(bias.unsqueeze(1))
        self._bias_flat = bias.reshape(-1)
        self._bias_cache = {}                   # (kind, key, dtype) -> prepared bias

    def _row_bias(self, fold, out_dtype):
        key = ("row", fold, jnp.dtype(out_dtype).name)
        if key not in self._bias_cache:
            b = self._bias_flat.astype(out_dtype)
            if fold > 1:
                b = jnp.tile(b, fold)
            self._bias_cache[key] = b.reshape(1, -1)
        return self._bias_cache[key]

    def _col_bias(self, tile_rows, channels, out_dtype):
        key = ("col", tile_rows, jnp.dtype(out_dtype).name)
        if key not in self._bias_cache:
            b = jnp.tile(self._bias_flat.astype(out_dtype), tile_rows // channels)
            self._bias_cache[key] = b.reshape(tile_rows, 1)
        return self._bias_cache[key]

    def __call__(self, x, donate_x=False):
        # PyTorch-style type promotion (e.g. bf16 x + f32 bias -> f32); the actual cast
        # of x happens inside the kernel so it reads x at its native width.
        out_dtype = jnp.promote_types(x.dtype, self._bias.dtype)

        if x.ndim == 2:
            n, f = x.shape
            g = _fold_rows_into_lanes(n, f)
            if g > 1:
                # Lane-dense path for narrow F: (N, F) -> (N//g, g*F), g*F % 128 == 0.
                out = _add_bias_2d(x.reshape(n // g, g * f),
                                   self._row_bias(g, out_dtype), out_dtype, donate_x)
                return out.reshape(n, f)
            return _add_bias_2d(x, self._row_bias(1, out_dtype), out_dtype, donate_x)

        elif x.ndim == 4:
            # x: (N, C, H, W); bias broadcast as (1, C, 1, 1).  Reshape only (no
            # transpose): rows are (n, c) pairs, lanes are H*W -> lane-dense stores.
            n, c, h, w = x.shape
            rows, lanes = n * c, h * w
            out_itemsize = jnp.dtype(out_dtype).itemsize
            tr = _choose_tile_rows(rows, lanes,
                                   max(x.dtype.itemsize, out_itemsize),
                                   row_align=math.lcm(8, c))
            bias_col = self._col_bias(tr, c, out_dtype)   # C-periodic, resident
            out = _add_bias_rows(x.reshape(rows, lanes), bias_col, tr,
                                 out_dtype, donate_x)
            return out.reshape(n, c, h, w)

        else:
            # TODO(synk): PyTorch's else-branch assumes 4-D (NCHW); other ranks unused.
            raise ValueError(f"unsupported input rank {x.ndim}")


if __name__ == "__main__":
    key = jax.random.PRNGKey(0)
    k_b2, k_x2, k_x2b, k_b4, k_x4, k_x4b = jax.random.split(key, 6)

    # ---- 2-D case: x (N, F) = (2, 32) ----
    F = 32
    bias2 = jax.random.normal(k_b2, (F,), dtype=jnp.float32)
    x2 = jax.random.normal(k_x2, (2, F), dtype=jnp.float32)
    mod2 = AddBiasPallas(bias2)
    out2 = jax.block_until_ready(mod2(x2))
    ref2 = x2 + bias2.reshape(1, F)
    assert out2.shape == x2.shape and out2.dtype == x2.dtype
    assert jnp.allclose(out2, ref2, atol=1e-6), "2D mismatch"

    # ---- 2-D lane-dense fold path: x (8, 32) -> folded to (2, 128) ----
    x2b = jax.random.normal(k_x2b, (8, F), dtype=jnp.float32)
    out2b = jax.block_until_ready(mod2(x2b))
    ref2b = x2b + bias2.reshape(1, F)
    assert out2b.shape == x2b.shape and out2b.dtype == x2b.dtype
    assert jnp.allclose(out2b, ref2b, atol=1e-6), "2D folded mismatch"

    # ---- 4-D case: x (N, C, H, W) = (2, 4, 16, 16), NCHW like PyTorch ----
    C = 4
    bias4 = jax.random.normal(k_b4, (C,), dtype=jnp.float32)
    x4 = jax.random.normal(k_x4, (2, C, 16, 16), dtype=jnp.float32)
    mod4 = AddBiasPallas(bias4)
    out4 = jax.block_until_ready(mod4(x4))
    ref4 = x4 + bias4.reshape(1, C, 1, 1)
    assert out4.shape == x4.shape and out4.dtype == x4.dtype
    assert jnp.allclose(out4, ref4, atol=1e-6), "4D mismatch"

    # ---- 4-D mixed-dtype case: bf16 x + f32 bias -> f32 (in-kernel promotion) ----
    x4b = jax.random.normal(k_x4b, (2, C, 16, 16), dtype=jnp.bfloat16)
    out4b = jax.block_until_ready(mod4(x4b))
    ref4b = x4b.astype(jnp.float32) + bias4.reshape(1, C, 1, 1)
    assert out4b.shape == x4b.shape and out4b.dtype == jnp.float32
    assert jnp.allclose(out4b, ref4b, atol=1e-6), "4D mixed-dtype mismatch"

    print("KERNEL_OK")
</pallas_src>

<mosaic_0001>
module attributes {stable_mosaic.version = 11 : i64} {
  func.func @_add_row_bias_kernel(%arg0: i32, %arg1: memref<2x32xf32, #tpu.memory_space<vmem>>, %arg2: memref<1x32xf32, #tpu.memory_space<vmem>>, %arg3: memref<2x32xf32, #tpu.memory_space<vmem>>) attributes {dimension_semantics = [#tpu.dimension_semantics<parallel>], iteration_bounds = array<i64: 1>, scalar_prefetch = 0 : i64, scratch_operands = 0 : i64, tpu.core_type = #tpu.core_type<tc>, window_params = [{transform_indices = @transform_0, window_bounds = array<i64: 2, 32>}, {pipeline_mode = #tpu.pipeline_mode<synchronous>, transform_indices = @transform_1, window_bounds = array<i64: 1, 32>}, {transform_indices = @transform_2, window_bounds = array<i64: 2, 32>}]} {
    %c0 = arith.constant 0 : index
    %c0_0 = arith.constant 0 : index
    %0 = vector.load %arg1[%c0, %c0_0] : memref<2x32xf32, #tpu.memory_space<vmem>>, vector<2x32xf32>
    %c0_1 = arith.constant 0 : index
    %c0_2 = arith.constant 0 : index
    %1 = vector.load %arg2[%c0_1, %c0_2] : memref<1x32xf32, #tpu.memory_space<vmem>>, vector<1x32xf32>
    %2 = vector.broadcast %1 : vector<1x32xf32> to vector<2x32xf32>
    %3 = arith.addf %0, %2 : vector<2x32xf32>
    %c0_3 = arith.constant 0 : index
    %c0_4 = arith.constant 0 : index
    %4 = vector.load %arg3[%c0_3, %c0_4] : memref<2x32xf32, #tpu.memory_space<vmem>>, vector<2x32xf32>
    tpu.vector_store %arg3[%c0_3, %c0_4], %3 {strides = array<i32>} : memref<2x32xf32, #tpu.memory_space<vmem>>, vector<2x32xf32>,
    return
  }
  func.func @transform_0(%arg0: i32) -> (i32, i32) {
    %c0_i32 = arith.constant 0 : i32
    %c0_i32_0 = arith.constant 0 : i32
    return %arg0, %c0_i32 : i32, i32
  }
  func.func @transform_1(%arg0: i32) -> (i32, i32) {
    %c0_i32 = arith.constant 0 : i32
    %c0_i32_0 = arith.constant 0 : i32
    %c0_i32_1 = arith.constant 0 : i32
    return %c0_i32, %c0_i32_0 : i32, i32
  }
  func.func @transform_2(%arg0: i32) -> (i32, i32) {
    %c0_i32 = arith.constant 0 : i32
    %c0_i32_0 = arith.constant 0 : i32
    return %arg0, %c0_i32 : i32, i32
  }
}

</mosaic_0001>

<llo_original>
// kernel: tpu_custom_call.1
$region0: #{tpu_custom_call.1}
  #allocation0 [shape = 'u32[]', space=smem, size = 0x4, offset = 0x4, fixed_abs, tag = 'smem constant byte address 0x4 - core index']
  #allocation1 [shape = 'u32[144,128]{1,0:T(1,128)}', space=vmem, size = 0x12000, scoped, tag = 'internal scratch']
  %s0 = inlined_call_operand.hbm [shape: f32[2,32], index: 0, kind: input, shape index: {}]
  %s1 = inlined_call_operand.vmem [shape: f32[1,32], index: 1, kind: input, shape index: {}]
  %s2 = inlined_call_operand.hbm [shape: f32[2,32], index: 2, kind: output, shape index: {}]
  %s3 = sld [smem:[#allocation0]]
  $region22: #{tpu_custom_call.1} parent=0
    _
  %s5 = ssub.s32 1, %s3
  %s6 = scalar_select 0, %s5, %s3
  $region1: #{tpu_custom_call.1} parent=0
    #allocation2 [shape = 'u8[1024]{0}', space=vmem, size = 0x400, scoped, tag = 'input window, operand 0, single buffered']
    #allocation3 [shape = 's32[1]{0}', space=sflag, size = 0x4, scoped, tag = 'scoped memory for tpu_custom_call.1']
    #allocation4 [shape = 's32[1]{0}', space=sflag, size = 0x4, scoped, tag = 'scoped memory for tpu_custom_call.1']
    #allocation5 [shape = 'u8[1024]{0}', space=vmem, size = 0x400, scoped, tag = 'output window, operand 0, single buffered']
    %7 = vsyncpa [#allocation3], 0
    %8 = vsyncpa [#allocation4], 0
    // Predicated region
    $region2: #{tpu_custom_call.1} parent=1 // pred_check
      _
    $region3: #{tpu_custom_call.1} parent=1 // pred_check_branch
      %10 = sbr.rel (0) target = $region5
    $region4: #{tpu_custom_call.1} parent=1 // pred_region
      %s12 = ssub.s32 32, 32
      %13 = vsyncadd [#allocation3], %s12
      %s15 = sshll.u32 [#allocation2], 4
      %s16 = int_to_ptr.vmem [resolvable:$true] %s15
      %18 = dma.hbm_to_vmem [thread:$0]  %s0, 32, %s16, [#allocation3]
    $region5: #{tpu_custom_call.1} parent=1 // pred_fallthru
      _
    // Predicated region
    $region6: #{tpu_custom_call.1} parent=1 // pred_check
      _
    $region7: #{tpu_custom_call.1} parent=1 // pred_check_branch
      %20 = sbr.rel (0) target = $region9
    $region8: #{tpu_custom_call.1} parent=1 // pred_region
      _
    $region9: #{tpu_custom_call.1} parent=1 // pred_fallthru
      _
    // Predicated region
    $region10: #{tpu_custom_call.1} parent=1 // pred_check
      _
    $region11: #{tpu_custom_call.1} parent=1 // pred_check_branch
      %22 = sbr.rel (0) target = $region13
    $region12: #{tpu_custom_call.1} parent=1 // pred_region
      %23 = dma.done [#allocation3], 32
    $region13: #{tpu_custom_call.1} parent=1 // pred_fallthru
      _
    %v24 = vld [vmem:[#allocation2] sm:$0x3]
    %v25 = vld [vmem:[%s1] sm:$0x1]
    %v27 = vlaneseq
    %v28 = vshrl.u32 %v27, 7
    %v29 = vsub.s32 0, %v28
    %v30 = vrot.slane %v25, %v29
    %v32 = vadd.f32 %v24, %v30
    %vm33 = vcmask 254976
    %34 = vst.msk [vmem:[#allocation5] sm:$0x3] %vm33, %v32
    // Predicated region
    $region14: #{tpu_custom_call.1} parent=1 // pred_check
      _
    $region15: #{tpu_custom_call.1} parent=1 // pred_check_branch
      %36 = sbr.rel (0) target = $region17
    $region16: #{tpu_custom_call.1} parent=1 // pred_region
      %s38 = ssub.s32 32, 32
      %39 = vsyncadd [#allocation4], %s38
      %s41 = sshll.u32 [#allocation5], 4
      %s42 = int_to_ptr.vmem [resolvable:$true] %s41
      %44 = dma.vmem_to_hbm [thread:$0]  %s42, 32, %s2, [#allocation4]
    $region17: #{tpu_custom_call.1} parent=1 // pred_fallthru
      _
    // Predicated region
    $region18: #{tpu_custom_call.1} parent=1 // pred_check
      _
    $region19: #{tpu_custom_call.1} parent=1 // pred_check_branch
      %46 = sbr.rel (0) target = $region21
    $region20: #{tpu_custom_call.1} parent=1 // pred_region
      %47 = dma.done [#allocation4], 32
    $region21: #{tpu_custom_call.1} parent=1 // pred_fallthru
      _
    %48 = vsyncpa [#allocation3], 1
    %49 = vsyncpa [#allocation4], 1

</llo_original>
